<compile_context>
chip_gen: v6e
topology: v6e:2x2x1
jax: 0.10.0
libtpu: 0.0.40
codegen_flags: <defaults>
</compile_context>

<pallas_src>
import functools

import jax
import jax.numpy as jnp
from jax import lax
from jax.experimental import pallas as pl
from jax.experimental.pallas import tpu as pltpu

LANES = 128
SUBLANES = 8
CHUNK = SUBLANES * LANES          # 1024 elements: zero-copy reshape granule
MAX_TILE_ROWS = 2048              # (2048, 128) f32 = 1 MiB per input tile
MIN_STEPS_PER_CORE = 4            # keep the DMA pipeline busy per TensorCore


def _detect_num_tensorcores() -> int:
    """2 TensorCores per chip on v7x; 1 on v5e/v6e (conservative default 1)."""
    try:
        kind = jax.devices()[0].device_kind.lower()
    except Exception:
        return 1
    return 2 if "v7" in kind else 1


def _mask_error_kernel(inp_ref, tgt_ref, out_ref, acc_l_ref, acc_m_ref, *,
                       rows, block_rows, blocks_per_core, exact):
    c = pl.program_id(0)      # core-split axis ("parallel")
    i = pl.program_id(1)      # sequential accumulation axis ("arbitrary")

    @pl.when(i == 0)
    def _init():
        acc_l_ref[...] = jnp.zeros_like(acc_l_ref)
        acc_m_ref[...] = jnp.zeros_like(acc_m_ref)

    nslabs = block_rows // SUBLANES
    unroll = min(8, nslabs)
    block_start = (c * blocks_per_core + i) * block_rows

    def accumulate(masked):
        # Walk the tile in (8,128) slabs so the elementwise chain and the
        # running accumulators stay register-resident (one vreg each).
        def body(s, carry):
            acc_l, acc_m = carry
            r0 = pl.multiple_of(s * SUBLANES, SUBLANES)
            x = inp_ref[pl.ds(r0, SUBLANES), :].astype(jnp.float32)
            t = tgt_ref[pl.ds(r0, SUBLANES), :].astype(jnp.float32)
            m = (t != -1.0).astype(jnp.float32)
            l1 = jnp.abs(jnp.tanh(x) - t) * m
            if masked:
                # Boundary / clamped-duplicate block only: zero out-of-range
                # rows.  The where on l1 also discards any NaN garbage from
                # the DMA overhang of a partial last block.
                row_ids = (block_start + r0 +
                           lax.broadcasted_iota(jnp.int32, (SUBLANES, LANES), 0))
                valid = row_ids < rows
                l1 = jnp.where(valid, l1, 0.0)
                m = jnp.where(valid, m, 0.0)
            return acc_l + l1, acc_m + m

        zero = jnp.zeros((SUBLANES, LANES), jnp.float32)
        acc_l, acc_m = lax.fori_loop(0, nslabs, body, (zero, zero),
                                     unroll=unroll)
        acc_l_ref[...] += acc_l
        acc_m_ref[...] += acc_m

    if exact:
        # Grid tiles `rows` exactly: no validity machinery is traced at all.
        accumulate(masked=False)
    else:
        is_full = block_start + block_rows <= rows

        @pl.when(is_full)
        def _interior():          # full in-range block: zero masking cost
            accumulate(masked=False)

        @pl.when(jnp.logical_not(is_full))
        def _boundary():          # partial last block or clamped duplicate
            accumulate(masked=True)

    @pl.when(i == pl.num_programs(1) - 1)
    def _finalize():
        out_ref[0, 0] = jnp.sum(acc_l_ref[...])
        out_ref[0, 1] = jnp.sum(acc_m_ref[...])


def mask_error_loss(inp, tgt):
    """Pallas implementation of MaskErrorLoss.forward(input, target)."""
    assert inp.shape == tgt.shape
    flat_i = inp.reshape(-1)
    flat_t = tgt.reshape(-1)
    n = flat_i.size

    # Kernel consumes the prefix that is a multiple of 8*128 elements; the
    # tiny tail is handled with plain JAX (no whole-tensor pad copy).
    n_main = (n // CHUNK) * CHUNK

    if n_main < n:
        ti = flat_i[n_main:].astype(jnp.float32)
        tt = flat_t[n_main:].astype(jnp.float32)
        tm = (tt != -1.0).astype(jnp.float32)
        tail_loss = jnp.sum(jnp.abs(jnp.tanh(ti) - tt) * tm)
        tail_mask = jnp.sum(tm)
        flat_i = flat_i[:n_main]
        flat_t = flat_t[:n_main]
    else:
        tail_loss = jnp.float32(0.0)
        tail_mask = jnp.float32(0.0)

    if n_main == 0:   # everything fit in the tail
        return tail_loss / tail_mask

    rows = n_main // LANES                       # multiple of 8
    a = flat_i.reshape(rows, LANES)              # original HBM dtype kept
    b = flat_t.reshape(rows, LANES)

    num_cores = _detect_num_tensorcores()

    # Cap at MAX_TILE_ROWS, but shrink so every core gets at least
    # MIN_STEPS_PER_CORE pipeline steps (DMA/compute overlap + load balance).
    target_rows = (rows // (num_cores * MIN_STEPS_PER_CORE)) // SUBLANES * SUBLANES
    block_rows = min(MAX_TILE_ROWS, max(SUBLANES, target_rows), rows)

    nblocks = pl.cdiv(rows, block_rows)
    num_cores = min(num_cores, nblocks)
    blocks_per_core = pl.cdiv(nblocks, num_cores)
    exact = (num_cores * blocks_per_core * block_rows == rows)

    def in_index(c, i):
        # Clamp so the DMA source block always starts in range; any clamped
        # duplicate block is fully zeroed by the in-kernel validity mask.
        return (jnp.minimum(c * blocks_per_core + i, nblocks - 1), 0)

    kernel = functools.partial(
        _mask_error_kernel,
        rows=rows, block_rows=block_rows, blocks_per_core=blocks_per_core,
        exact=exact)

    cost = pl.CostEstimate(
        flops=6 * n_main,
        transcendentals=n_main,
        bytes_accessed=n_main * (a.dtype.itemsize + b.dtype.itemsize)
        + 8 * num_cores)

    sums = pl.pallas_call(
        kernel,
        out_shape=jax.ShapeDtypeStruct((num_cores, 2), jnp.float32),
        grid_spec=pltpu.PrefetchScalarGridSpec(
            num_scalar_prefetch=0,
            grid=(num_cores, blocks_per_core),
            in_specs=[
                pl.BlockSpec((block_rows, LANES), in_index),
                pl.BlockSpec((block_rows, LANES), in_index),
            ],
            out_specs=pl.BlockSpec(
                (1, 2), lambda c, i: (c, 0),
                memory_space=pltpu.MemorySpace.SMEM),
            scratch_shapes=[
                pltpu.VMEM((SUBLANES, LANES), jnp.float32),
                pltpu.VMEM((SUBLANES, LANES), jnp.float32),
            ],
        ),
        compiler_params=pltpu.CompilerParams(
            dimension_semantics=("parallel", "arbitrary")),
        cost_estimate=cost,
    )(a, b)

    loss_sum = jnp.sum(sums[:, 0]) + tail_loss
    mask_sum = jnp.sum(sums[:, 1]) + tail_mask
    # Divide-by-zero -> NaN/Inf matches the torch reference when mask.sum()==0.
    return loss_sum / mask_sum


def _reference(inp, tgt):
    mask = (tgt != -1.0).astype(jnp.float32)
    loss = jnp.abs(jnp.tanh(inp) - tgt) * mask
    return jnp.sum(loss) / jnp.sum(mask)


if __name__ == "__main__":
    key = jax.random.PRNGKey(0)

    def make_inputs(k, shape):
        k_in, k_tgt, k_msk = jax.random.split(k, 3)
        x = jax.random.normal(k_in, shape, dtype=jnp.float32)
        tgt_vals = jax.random.uniform(k_tgt, shape, minval=-0.9, maxval=0.9)
        ignore = jax.random.uniform(k_msk, shape) < 0.3
        t = jnp.where(ignore, -1.0, tgt_vals).astype(jnp.float32)
        return x, t

    fn = jax.jit(mask_error_loss)

    shapes = [
        (2, 4, 16, 16),   # 2048 elems: exact tiling, pure fast path
        (3, 24, 128),     # 9216 elems: exercises the gated boundary-block mask
        (5, 231),         # 1155 elems: kernel prefix + plain-JAX tail
    ]
    keys = jax.random.split(key, len(shapes))
    for k, shape in zip(keys, shapes):
        x, t = make_inputs(k, shape)
        got = fn(x, t)
        jax.block_until_ready(got)
        want = _reference(x, t)
        assert jnp.allclose(got, want, rtol=1e-5, atol=1e-6), (shape, got, want)

    print("KERNEL_OK")
</pallas_src>

<mosaic_0001>
module attributes {stable_mosaic.version = 11 : i64} {
  func.func @_mask_error_kernel(%arg0: i32, %arg1: i32, %arg2: memref<8x128xf32, #tpu.memory_space<vmem>>, %arg3: memref<8x128xf32, #tpu.memory_space<vmem>>, %arg4: memref<1x2xf32, #tpu.memory_space<smem>>, %arg5: memref<8x128xf32, #tpu.memory_space<vmem>>, %arg6: memref<8x128xf32, #tpu.memory_space<vmem>>) attributes {dimension_semantics = [#tpu.dimension_semantics<parallel>, #tpu.dimension_semantics<arbitrary>], iteration_bounds = array<i64: 1, 2>, scalar_prefetch = 0 : i64, scratch_operands = 2 : i64, tpu.core_type = #tpu.core_type<tc>, window_params = [{transform_indices = @transform_0, window_bounds = array<i64: 8, 128>}, {transform_indices = @transform_1, window_bounds = array<i64: 8, 128>}, {transform_indices = @transform_2, window_bounds = array<i64: 1, 2>}]} {
    %c0_i32 = arith.constant 0 : i32
    %0 = arith.cmpi eq, %arg1, %c0_i32 : i32
    %1 = arith.extui %0 : i1 to i32
    %c0_i32_0 = arith.constant 0 : i32
    %2 = arith.cmpi ne, %1, %c0_i32_0 : i32
    scf.if %2 {
      %cst_14 = arith.constant 0.000000e+00 : f32
      %29 = vector.broadcast %cst_14 : f32 to vector<8x128xf32>
      %c0_15 = arith.constant 0 : index
      %c0_16 = arith.constant 0 : index
      %30 = vector.load %arg5[%c0_15, %c0_16] : memref<8x128xf32, #tpu.memory_space<vmem>>, vector<8x128xf32>
      tpu.vector_store %arg5[%c0_15, %c0_16], %29 {strides = array<i32>} : memref<8x128xf32, #tpu.memory_space<vmem>>, vector<8x128xf32>,
      %cst_17 = arith.constant 0.000000e+00 : f32
      %31 = vector.broadcast %cst_17 : f32 to vector<8x128xf32>
      %c0_18 = arith.constant 0 : index
      %c0_19 = arith.constant 0 : index
      %32 = vector.load %arg6[%c0_18, %c0_19] : memref<8x128xf32, #tpu.memory_space<vmem>>, vector<8x128xf32>
      tpu.vector_store %arg6[%c0_18, %c0_19], %31 {strides = array<i32>} : memref<8x128xf32, #tpu.memory_space<vmem>>, vector<8x128xf32>,
    } else {
    }
    %cst = arith.constant 0.000000e+00 : f32
    %3 = vector.broadcast %cst : f32 to vector<8x128xf32>
    %c0_i32_1 = arith.constant 0 : i32
    %c8_i32 = arith.constant 8 : i32
    %4 = arith.muli %c0_i32_1, %c8_i32 : i32
    %5 = tpu.assume_multiple %4, 8 : i32
    %6 = arith.index_cast %5 : i32 to index
    %c0 = arith.constant 0 : index
    %7 = vector.load %arg2[%6, %c0] : memref<8x128xf32, #tpu.memory_space<vmem>>, vector<8x128xf32>
    %8 = arith.index_cast %5 : i32 to index
    %c0_2 = arith.constant 0 : index
    %9 = vector.load %arg3[%8, %c0_2] : memref<8x128xf32, #tpu.memory_space<vmem>>, vector<8x128xf32>
    %cst_3 = arith.constant -1.000000e+00 : f32
    %10 = vector.broadcast %cst_3 : f32 to vector<8x128xf32>
    %11 = arith.cmpf one, %9, %10 : vector<8x128xf32>
    %12 = arith.extui %11 : vector<8x128xi1> to vector<8x128xi32>
    %13 = arith.sitofp %12 : vector<8x128xi32> to vector<8x128xf32>
    %14 = math.tanh %7 : vector<8x128xf32>
    %15 = arith.subf %14, %9 : vector<8x128xf32>
    %16 = math.absf %15 : vector<8x128xf32>
    %17 = arith.mulf %16, %13 : vector<8x128xf32>
    %18 = arith.addf %3, %17 : vector<8x128xf32>
    %19 = arith.addf %3, %13 : vector<8x128xf32>
    %c1_i32 = arith.constant 1 : i32
    %c0_4 = arith.constant 0 : index
    %c0_5 = arith.constant 0 : index
    %20 = vector.load %arg5[%c0_4, %c0_5] : memref<8x128xf32, #tpu.memory_space<vmem>>, vector<8x128xf32>
    %21 = arith.addf %20, %18 : vector<8x128xf32>
    %c0_6 = arith.constant 0 : index
    %c0_7 = arith.constant 0 : index
    %22 = vector.load %arg5[%c0_6, %c0_7] : memref<8x128xf32, #tpu.memory_space<vmem>>, vector<8x128xf32>
    tpu.vector_store %arg5[%c0_6, %c0_7], %21 {strides = array<i32>} : memref<8x128xf32, #tpu.memory_space<vmem>>, vector<8x128xf32>,
    %c0_8 = arith.constant 0 : index
    %c0_9 = arith.constant 0 : index
    %23 = vector.load %arg6[%c0_8, %c0_9] : memref<8x128xf32, #tpu.memory_space<vmem>>, vector<8x128xf32>
    %24 = arith.addf %23, %19 : vector<8x128xf32>
    %c0_10 = arith.constant 0 : index
    %c0_11 = arith.constant 0 : index
    %25 = vector.load %arg6[%c0_10, %c0_11] : memref<8x128xf32, #tpu.memory_space<vmem>>, vector<8x128xf32>
    tpu.vector_store %arg6[%c0_10, %c0_11], %24 {strides = array<i32>} : memref<8x128xf32, #tpu.memory_space<vmem>>, vector<8x128xf32>,
    %c1_i32_12 = arith.constant 1 : i32
    %26 = arith.cmpi eq, %arg1, %c1_i32_12 : i32
    %27 = arith.extui %26 : i1 to i32
    %c0_i32_13 = arith.constant 0 : i32
    %28 = arith.cmpi ne, %27, %c0_i32_13 : i32
    scf.if %28 {
      %c0_14 = arith.constant 0 : index
      %c0_15 = arith.constant 0 : index
      %29 = vector.load %arg5[%c0_14, %c0_15] : memref<8x128xf32, #tpu.memory_space<vmem>>, vector<8x128xf32>
      %30 = vector.shape_cast %29 : vector<8x128xf32> to vector<1x8x128xf32>
      %cst_16 = arith.constant dense<0.000000e+00> : vector<1xf32>
      %31 = vector.multi_reduction <add>, %30, %cst_16 [1, 2] : vector<1x8x128xf32> to vector<1xf32>
      %32 = vector.shape_cast %31 : vector<1xf32> to vector<1x1x1xf32>
      %33 = vector.extract %32[0, 0, 0] : f32 from vector<1x1x1xf32>
      %c0_17 = arith.constant 0 : index
      %c0_18 = arith.constant 0 : index
      %34 = memref.load %arg4[%c0_17, %c0_18] : memref<1x2xf32, #tpu.memory_space<smem>>
      memref.store %33, %arg4[%c0_17, %c0_18] : memref<1x2xf32, #tpu.memory_space<smem>>
      %c0_19 = arith.constant 0 : index
      %c0_20 = arith.constant 0 : index
      %35 = vector.load %arg6[%c0_19, %c0_20] : memref<8x128xf32, #tpu.memory_space<vmem>>, vector<8x128xf32>
      %36 = vector.shape_cast %35 : vector<8x128xf32> to vector<1x8x128xf32>
      %cst_21 = arith.constant dense<0.000000e+00> : vector<1xf32>
      %37 = vector.multi_reduction <add>, %36, %cst_21 [1, 2] : vector<1x8x128xf32> to vector<1xf32>
      %38 = vector.shape_cast %37 : vector<1xf32> to vector<1x1x1xf32>
      %39 = vector.extract %38[0, 0, 0] : f32 from vector<1x1x1xf32>
      %c0_22 = arith.constant 0 : index
      %c1 = arith.constant 1 : index
      %40 = memref.load %arg4[%c0_22, %c1] : memref<1x2xf32, #tpu.memory_space<smem>>
      memref.store %39, %arg4[%c0_22, %c1] : memref<1x2xf32, #tpu.memory_space<smem>>
    } else {
    }
    return
  }
  func.func @transform_0(%arg0: i32, %arg1: i32) -> (i32, i32) {
    %c2_i32 = arith.constant 2 : i32
    %0 = arith.muli %arg0, %c2_i32 : i32
    %1 = arith.addi %0, %arg1 : i32
    %c1_i32 = arith.constant 1 : i32
    %2 = arith.minsi %1, %c1_i32 : i32
    %c0_i32 = arith.constant 0 : i32
    %c0_i32_0 = arith.constant 0 : i32
    return %2, %c0_i32 : i32, i32
  }
  func.func @transform_1(%arg0: i32, %arg1: i32) -> (i32, i32) {
    %c2_i32 = arith.constant 2 : i32
    %0 = arith.muli %arg0, %c2_i32 : i32
    %1 = arith.addi %0, %arg1 : i32
    %c1_i32 = arith.constant 1 : i32
    %2 = arith.minsi %1, %c1_i32 : i32
    %c0_i32 = arith.constant 0 : i32
    %c0_i32_0 = arith.constant 0 : i32
    return %2, %c0_i32 : i32, i32
  }
  func.func @transform_2(%arg0: i32, %arg1: i32) -> (i32, i32) {
    %c0_i32 = arith.constant 0 : i32
    %c0_i32_0 = arith.constant 0 : i32
    return %arg0, %c0_i32 : i32, i32
  }
}

</mosaic_0001>

<llo_original>
// kernel: mask_error_loss.1
$region0: #{mask_error_loss.1}
  #allocation0 [shape = 'u32[]', space=smem, size = 0x4, offset = 0x4, fixed_abs, tag = 'smem constant byte address 0x4 - core index']
  #allocation1 [shape = 'u32[144,128]{1,0:T(1,128)}', space=vmem, size = 0x12000, scoped, tag = 'internal scratch']
  #allocation2 [shape = 'f32[8,128]{1,0:T(8,128)}', space=vmem, size = 0x1000, scoped, tag = 'scratch operand']
  #allocation3 [shape = 'f32[8,128]{1,0:T(8,128)}', space=vmem, size = 0x1000, scoped, tag = 'scratch operand']
  %s0 = inlined_call_operand.vmem [shape: f32[16,128], index: 0, kind: input, shape index: {}]
  %s1 = inlined_call_operand.vmem [shape: f32[16,128], index: 1, kind: input, shape index: {}]
  %s2 = inlined_call_operand.vmem [shape: f32[1,2], index: 2, kind: output, shape index: {}]
  %s3 = sld [smem:[#allocation0]]
  $region49: #{mask_error_loss.1} parent=0
    _
  %s5 = ssub.s32 1, %s3
  %s6 = scalar_select 0, %s5, %s3
  $region1: #{mask_error_loss.1} parent=0
    #allocation4 [shape = 'u8[512]{0}', space=smem, size = 0x200, scoped, tag = 'output window, operand 0, single buffered']
    #allocation5 [shape = 's32[2]{0}', space=sflag, size = 0x8, scoped, tag = 'scoped memory for mask_error_loss.1']
    %7 = vsyncpa [#allocation5], 0
    loop: start=0, step=1, limit=4
    $region2: #{mask_error_loss.1} parent=1 // loop_pre_header
      _
    $region3: #{mask_error_loss.1} parent=1 // loop_header
      %s9 = sphi 0, %s13
      %p10 = scmp.ge.s32.totalorder %s9, 4
      %s16 = sphi 0, %s28
      %s17 = sphi 0, %s24
      %s18 = sphi 0, %s16
      %s19 = sphi 0, %s17
      %s20 = sphi 0, %s18
      %s21 = sphi 0, %s19
      %s39 = sphi 0, %s41
      %s42 = sphi 0, %s39
      %s43 = sphi 0, %s42
      %s59 = sphi 0, %s43
      %s73 = sphi 0, %s75
      %s76 = sphi 0, %s73
      %s77 = sphi 0, %s76
      %s93 = sphi 0, %s77
      %s99 = sphi 0, %s101
      %s102 = sphi 0, %s99
      %s103 = sphi 0, %s102
      %s119 = sphi 0, %s103
    $region4: #{mask_error_loss.1} parent=1 // loop_header_branch
      %12 = sbr.rel (%p10) target = $region8
    $region5: #{mask_error_loss.1} parent=1 // loop_body
      %s14 = ssub.s32 %s9, 1
      %s15 = ssub.s32 %s9, 2
      %s22 = sadd.s32 1, %s17
      %p23 = scmp.ge.s32.totalorder %s22, 2
      %s24 = scalar_select %p23, 0, %s22
      %s25 = sadd.s32 1, %s16
      %s26 = scalar_select %p23, %s25, %s16
      %p27 = scmp.ge.s32.totalorder %s26, 1
      %s28 = scalar_select %p27, 0, %s26
      %s29 = smul.u32 %s16, 2
      %s30 = sadd.s32 %s29, %s17
      %p31 = scmp.lt.s32.totalorder %s30, 1
      %s32 = scalar_select %p31, %s30, 1
      %s33 = smul.u32 %s28, 2
      %s34 = sadd.s32 %s33, %s24
      %p35 = scmp.lt.s32.totalorder %s34, 1
      %s36 = scalar_select %p35, %s34, 1
      %s37 = ssub.s32 %s32, %s36
      %p38 = scmp.eq.s32.totalorder %s37, 0
      %s40 = sadd.s32 %s39, 1
      %s41 = scalar_select %p38, %s39, %s40
      %p44 = pneg %p38
      %p45 = scmp.eq.s32.totalorder %s9, 1
      %p46 = por %p44, %p45
      %p47 = scmp.ne.s32.totalorder %s39, %s42
      %p48 = scmp.eq.s32.totalorder %s9, 0
      %p49 = por %p47, %p48
      %p50 = scmp.ne.s32.totalorder %s39, %s42
      %p51 = scmp.eq.s32.totalorder %s14, 1
      %p52 = por %p50, %p51
      %p53 = scmp.ne.s32.totalorder %s42, %s43
      %p54 = scmp.eq.s32.totalorder %s14, 0
      %p55 = por %p53, %p54
      %p56 = scmp.ne.s32.totalorder %s42, %s43
      %p57 = scmp.eq.s32.totalorder %s15, 1
      %p58 = por %p56, %p57
      %p60 = scmp.ne.s32.totalorder %s43, %s59
      %p61 = scmp.eq.s32.totalorder %s15, 0
      %p62 = por %p60, %p61
      %s63 = smul.u32 %s16, 2
      %s64 = sadd.s32 %s63, %s17
      %p65 = scmp.lt.s32.totalorder %s64, 1
      %s66 = scalar_select %p65, %s64, 1
      %s67 = smul.u32 %s28, 2
      %s68 = sadd.s32 %s67, %s24
      %p69 = scmp.lt.s32.totalorder %s68, 1
      %s70 = scalar_select %p69, %s68, 1
      %s71 = ssub.s32 %s66, %s70
      %p72 = scmp.eq.s32.totalorder %s71, 0
      %s74 = sadd.s32 %s73, 1
      %s75 = scalar_select %p72, %s73, %s74
      %p78 = pneg %p72
      %p79 = scmp.eq.s32.totalorder %s9, 1
      %p80 = por %p78, %p79
      %p81 = scmp.ne.s32.totalorder %s73, %s76
      %p82 = scmp.eq.s32.totalorder %s9, 0
      %p83 = por %p81, %p82
      %p84 = scmp.ne.s32.totalorder %s73, %s76
      %p85 = scmp.eq.s32.totalorder %s14, 1
      %p86 = por %p84, %p85
      %p87 = scmp.ne.s32.totalorder %s76, %s77
      %p88 = scmp.eq.s32.totalorder %s14, 0
      %p89 = por %p87, %p88
      %p90 = scmp.ne.s32.totalorder %s76, %s77
      %p91 = scmp.eq.s32.totalorder %s15, 1
      %p92 = por %p90, %p91
      %p94 = scmp.ne.s32.totalorder %s77, %s93
      %p95 = scmp.eq.s32.totalorder %s15, 0
      %p96 = por %p94, %p95
      %s97 = ssub.s32 %s16, %s28
      %p98 = scmp.eq.s32.totalorder %s97, 0
      %s100 = sadd.s32 %s99, 1
      %s101 = scalar_select %p98, %s99, %s100
      %p104 = pneg %p98
      %p105 = scmp.eq.s32.totalorder %s9, 1
      %p106 = por %p104, %p105
      %p107 = scmp.ne.s32.totalorder %s99, %s102
      %p108 = scmp.eq.s32.totalorder %s9, 0
      %p109 = por %p107, %p108
      %p110 = scmp.ne.s32.totalorder %s99, %s102
      %p111 = scmp.eq.s32.totalorder %s14, 1
      %p112 = por %p110, %p111
      %p113 = scmp.ne.s32.totalorder %s102, %s103
      %p114 = scmp.eq.s32.totalorder %s14, 0
      %p115 = por %p113, %p114
      %p116 = scmp.ne.s32.totalorder %s102, %s103
      %p117 = scmp.eq.s32.totalorder %s15, 1
      %p118 = por %p116, %p117
      %p120 = scmp.ne.s32.totalorder %s103, %s119
      %p121 = scmp.eq.s32.totalorder %s15, 0
      %p122 = por %p120, %p121
      %p123 = scmp.le.s32.totalorder 1, %s9
      %p124 = scmp.lt.s32.totalorder %s9, 3
      %p125 = pnand %p123, %p124
      %p126 = pneg %p125
      // Predicated region
      $region9: #{mask_error_loss.1} parent=5 // pred_check
        _
      $region10: #{mask_error_loss.1} parent=5 // pred_check_branch
        %128 = sbr.rel (%p125) target = $region12
      $region11: #{mask_error_loss.1} parent=5 // pred_region
        %s129 = ssub.s32 %s9, 1
      $region12: #{mask_error_loss.1} parent=5 // pred_fallthru
        _
      %p130 = scmp.lt.s32.totalorder %s9, 2
      // Predicated region
      $region13: #{mask_error_loss.1} parent=5 // pred_check
        %p131 = pneg %p130
      $region14: #{mask_error_loss.1} parent=5 // pred_check_branch
        %133 = sbr.rel (%p131) target = $region16
      $region15: #{mask_error_loss.1} parent=5 // pred_region
        // Predicated region
        $region17: #{mask_error_loss.1} parent=15 // pred_check
          %p134 = pneg %p49
        $region18: #{mask_error_loss.1} parent=15 // pred_check_branch
          %136 = sbr.rel (%p134) target = $region20
        $region19: #{mask_error_loss.1} parent=15 // pred_region
          %s137 = smul.u32 %s16, 2
          %s138 = sadd.s32 %s137, %s17
          %p139 = scmp.lt.s32.totalorder %s138, 1
          %s140 = scalar_select %p139, %s138, 1
          %p141 = scmp.lt.s32.totalorder %s140, 1
          %s142 = scalar_select %p141, %s140, 1
          %s143 = smul.addr %s142, 8
          %s144 = scalar_lea.vmem %s0, %s143
          %s145 = smul.u32 %s16, 2
          %s146 = sadd.s32 %s145, %s17
          %p147 = scmp.lt.s32.totalorder %s146, 1
          %s148 = scalar_select %p147, %s146, 1
        $region20: #{mask_error_loss.1} parent=15 // pred_fallthru
          _
        // Predicated region
        $region21: #{mask_error_loss.1} parent=15 // pred_check
          %p149 = pneg %p83
        $region22: #{mask_error_loss.1} parent=15 // pred_check_branch
          %151 = sbr.rel (%p149) target = $region24
        $region23: #{mask_error_loss.1} parent=15 // pred_region
          %s152 = smul.u32 %s16, 2
          %s153 = sadd.s32 %s152, %s17
          %p154 = scmp.lt.s32.totalorder %s153, 1
          %s155 = scalar_select %p154, %s153, 1
          %p156 = scmp.lt.s32.totalorder %s155, 1
          %s157 = scalar_select %p156, %s155, 1
          %s158 = smul.addr %s157, 8
          %s159 = scalar_lea.vmem %s1, %s158
          %s160 = smul.u32 %s16, 2
          %s161 = sadd.s32 %s160, %s17
          %p162 = scmp.lt.s32.totalorder %s161, 1
          %s163 = scalar_select %p162, %s161, 1
        $region24: #{mask_error_loss.1} parent=15 // pred_fallthru
          _
      $region16: #{mask_error_loss.1} parent=5 // pred_fallthru
        _
      %p164 = scmp.le.s32.totalorder 1, %s9
      %p165 = scmp.lt.s32.totalorder %s9, 3
      %p166 = pnand %p164, %p165
      %p167 = pneg %p166
      // Predicated region
      $region25: #{mask_error_loss.1} parent=5 // pred_check
        _
      $region26: #{mask_error_loss.1} parent=5 // pred_check_branch
        %169 = sbr.rel (%p166) target = $region28
      $region27: #{mask_error_loss.1} parent=5 // pred_region
        %s170 = ssub.s32 %s9, 1
        %s171 = smul.u32 %s18, 2
        %s172 = sadd.s32 %s171, %s19
        %p173 = scmp.lt.s32.totalorder %s172, 1
        %s174 = scalar_select %p173, %s172, 1
        %p175 = scmp.lt.s32.totalorder %s174, 1
        %s176 = scalar_select %p175, %s174, 1
        %s177 = smul.addr %s176, 8
        %s178 = scalar_lea.vmem %s0, %s177
        %p179 = pneg %p55
        %p180 = pneg %p52
        %s181 = smul.u32 %s18, 2
        %s182 = sadd.s32 %s181, %s19
        %p183 = scmp.lt.s32.totalorder %s182, 1
        %s184 = scalar_select %p183, %s182, 1
        %p185 = scmp.lt.s32.totalorder %s184, 1
        %s186 = scalar_select %p185, %s184, 1
        %s187 = smul.addr %s186, 8
        %s188 = scalar_lea.vmem %s1, %s187
        %p189 = pneg %p89
        %p190 = pneg %p86
        %p191 = pneg %p115
        %p192 = pneg %p112
        %s193 = smul.u32 %s18, 2
        %s194 = sadd.s32 %s193, %s19
        %p195 = scmp.lt.s32.totalorder %s194, 1
        %s196 = scalar_select %p195, %s194, 1
        %p197 = scmp.lt.s32.totalorder %s196, 1
        %s198 = scalar_select %p197, %s196, 1
        %s199 = smul.addr %s198, 8
        %s200 = scalar_lea.vmem %s0, %s199
        %s201 = smul.u32 %s18, 2
        %s202 = sadd.s32 %s201, %s19
        %p203 = scmp.lt.s32.totalorder %s202, 1
        %s204 = scalar_select %p203, %s202, 1
        %s205 = smul.u32 %s18, 2
        %s206 = sadd.s32 %s205, %s19
        %p207 = scmp.lt.s32.totalorder %s206, 1
        %s208 = scalar_select %p207, %s206, 1
        %p209 = scmp.lt.s32.totalorder %s208, 1
        %s210 = scalar_select %p209, %s208, 1
        %s211 = smul.addr %s210, 8
        %s212 = scalar_lea.vmem %s1, %s211
        %s213 = smul.u32 %s18, 2
        %s214 = sadd.s32 %s213, %s19
        %p215 = scmp.lt.s32.totalorder %s214, 1
        %s216 = scalar_select %p215, %s214, 1
        %p217 = scmp.eq.s32.totalorder %s19, 0
        // Predicated region
        $region29: #{mask_error_loss.1} parent=27 // pred_check
          %p218 = pneg %p217
        $region30: #{mask_error_loss.1} parent=27 // pred_check_branch
          %220 = sbr.rel (%p218) target = $region32
        $region31: #{mask_error_loss.1} parent=27 // pred_region
          %221 = vst [vmem:[#allocation2] sm:$0xff] 0.0
          %222 = vst [vmem:[#allocation3] sm:$0xff] 0.0
        $region32: #{mask_error_loss.1} parent=27 // pred_fallthru
          _
        %v223 = vld [vmem:[%s200] sm:$0xff]
        %v224 = vld [vmem:[%s212] sm:$0xff]
        %vm225 = vcmp.ne.f32.partialorder %v224, -1.0
        %v226 = vsel %vm225, 1, 0
        %v227 = vcvt.s32.f32 %v226
        %v228 = vtanh.pop %v223
        %v229 = vsub.f32 %v228, %v224
        %v230 = vand.u32 2147483647, %v229
        %v231 = vmul.f32 %v230, %v227
        %v232 = vadd.f32 %v231, 0.0
        %v233 = vadd.f32 %v227, 0.0
        %v234 = vld [vmem:[#allocation2] sm:$0xff]
        %v235 = vadd.f32 %v234, %v232
        %236 = vst [vmem:[#allocation2] sm:$0xff] %v235
        %v237 = vld [vmem:[#allocation3] sm:$0xff]
        %v238 = vadd.f32 %v237, %v233
        %239 = vst [vmem:[#allocation3] sm:$0xff] %v238
        %p240 = scmp.eq.s32.totalorder %s19, 1
        // Predicated region
        $region33: #{mask_error_loss.1} parent=27 // pred_check
          %p241 = pneg %p240
        $region34: #{mask_error_loss.1} parent=27 // pred_check_branch
          %243 = sbr.rel (%p241) target = $region36
        $region35: #{mask_error_loss.1} parent=27 // pred_region
          %v244 = vld [vmem:[#allocation2] sm:$0xff]
          %245 = vadd.xlane.f32.xlu0 %v244
          %v246 = vpop.xlane.xlu0 %245
          %v247 = vrot.slane %v246, 4
          %v248 = vadd.f32 %v246, %v247
          %v249 = vrot.slane %v248, 2
          %v250 = vadd.f32 %v248, %v249
          %v251 = vrot.slane %v250, 1
          %v252 = vadd.f32 %v250, %v251
          %s253 = vtos %v252
          %s254 = scalar_lea.smem [#allocation4], 0
          %255 = sst [smem:[%s254]] %s253
          %v256 = vld [vmem:[#allocation3] sm:$0xff]
          %257 = vadd.xlane.f32.xlu0 %v256
          %v258 = vpop.xlane.xlu0 %257
          %v259 = vrot.slane %v258, 4
          %v260 = vadd.f32 %v258, %v259
          %v261 = vrot.slane %v260, 2
          %v262 = vadd.f32 %v260, %v261
          %v263 = vrot.slane %v262, 1
          %v264 = vadd.f32 %v262, %v263
          %s265 = vtos %v264
          %s266 = scalar_lea.smem [#allocation4], 1
          %267 = sst [smem:[%s266]] %s265
        $region36: #{mask_error_loss.1} parent=27 // pred_fallthru
          _
        // Predicated region
        $region37: #{mask_error_loss.1} parent=27 // pred_check
          %p268 = pneg %p112
        $region38: #{mask_error_loss.1} parent=27 // pred_check_branch
          %270 = sbr.rel (%p268) target = $region40
        $region39: #{mask_error_loss.1} parent=27 // pred_region
          %s272 = ssub.s32 16, 16
          %273 = vsyncadd [#allocation5], %s272
          %s274 = scalar_lea.vmem %s2, %s18
          %s276 = sshll.u32 %s274, 4
          %s277 = int_to_ptr.vmem [resolvable:$true] %s276
          %279 = dma.smem_to_vmem [#allocation4], 16, %s277, [#allocation5]
        $region40: #{mask_error_loss.1} parent=27 // pred_fallthru
          _
        // Predicated region
        $region41: #{mask_error_loss.1} parent=27 // pred_check
          %p280 = pneg %p112
        $region42: #{mask_error_loss.1} parent=27 // pred_check_branch
          %282 = sbr.rel (%p280) target = $region44
        $region43: #{mask_error_loss.1} parent=27 // pred_region
          %283 = dma.done [#allocation5], 16
        $region44: #{mask_error_loss.1} parent=27 // pred_fallthru
          _
        %284 = sfence
      $region28: #{mask_error_loss.1} parent=5 // pred_fallthru
        _
      %p285 = scmp.le.s32.totalorder 2, %s9
      // Predicated region
      $region45: #{mask_error_loss.1} parent=5 // pred_check
        %p286 = pneg %p285
      $region46: #{mask_error_loss.1} parent=5 // pred_check_branch
        %288 = sbr.rel (%p286) target = $region48
      $region47: #{mask_error_loss.1} parent=5 // pred_region
        %s289 = ssub.s32 %s9, 2
      $region48: #{mask_error_loss.1} parent=5 // pred_fallthru
        _
    $region6: #{mask_error_loss.1} parent=1 // loop_footer
      %s13 = sadd.s32 1, %s9
    $region7: #{mask_error_loss.1} parent=1 // loop_footer_branch
      %8 = sbr.rel target = $region3
    $region8: #{mask_error_loss.1} parent=1 // loop_exit
      _
    %290 = vsyncpa [#allocation5], 1
    %s291 = scalar_lea.sflag [#allocation5], 1
    %292 = vsyncpa %s291, 1

</llo_original>
